<compile_context>
chip_gen: v6e
topology: v6e:2x2x1
jax: 0.10.0
libtpu: 0.0.40
codegen_flags: <defaults>
</compile_context>

<pallas_src>
import functools

import jax
import jax.numpy as jnp
from jax.experimental import pallas as pl
from jax.experimental.pallas import tpu as pltpu

VMEM_LIMIT_BYTES = 48 * 1024 * 1024


# --------------------------------------------------------------------------
# tiling helpers
# --------------------------------------------------------------------------
def _row_tile(m, bytes_per_row, target_bytes=2 * 1024 * 1024, max_rows=512):
    """Largest row tile (multiple of 8) that keeps one block ~target_bytes."""
    if m <= 8:
        return int(m)
    tr = max(8, target_bytes // max(int(bytes_per_row), 1))
    tr = min(tr, max_rows, m)
    if m >= 16:
        # keep at least 2 grid steps so both TensorCores get work (v7x)
        tr = min(tr, max(8, m // 2))
    tr = max(8, (tr // 8) * 8)
    return int(tr)


def _cparams():
    return pltpu.CompilerParams(
        dimension_semantics=("parallel",),
        vmem_limit_bytes=VMEM_LIMIT_BYTES,
    )


# --------------------------------------------------------------------------
# kernel 1: matmul + bias + activation  (all 1x1 convs / Linear layers)
# --------------------------------------------------------------------------
def _matmul_bias_act_kernel(x_ref, w_ref, b_ref, o_ref, *, act):
    y = jnp.dot(x_ref[...], w_ref[...], preferred_element_type=jnp.float32)
    y = y + b_ref[...]
    if act == "lrelu":
        y = jnp.where(y > 0, y, 0.1 * y)
    elif act == "sigmoid":
        y = jax.nn.sigmoid(y)
    o_ref[...] = y.astype(o_ref.dtype)


def matmul_bias_act(x2, w, b, act="none"):
    """x2: (M, K), w: (K, Nc), b: (Nc,) -> (M, Nc)."""
    M, K = x2.shape
    Nc = w.shape[1]
    tm = _row_tile(M, K * x2.dtype.itemsize)
    grid = (pl.cdiv(M, tm),)
    return pl.pallas_call(
        functools.partial(_matmul_bias_act_kernel, act=act),
        out_shape=jax.ShapeDtypeStruct((M, Nc), x2.dtype),
        grid_spec=pltpu.PrefetchScalarGridSpec(
            num_scalar_prefetch=0,
            grid=grid,
            in_specs=[
                pl.BlockSpec((tm, K), lambda i: (i, 0)),
                pl.BlockSpec((K, Nc), lambda i: (0, 0)),
                pl.BlockSpec((1, Nc), lambda i: (0, 0)),
            ],
            out_specs=pl.BlockSpec((tm, Nc), lambda i: (i, 0)),
        ),
        compiler_params=_cparams(),
    )(x2, w, b.reshape(1, Nc))


def conv1x1(x, w, b, act="none"):
    """1x1 conv:  x (N, Cin, H, W), w (Cin, Cout), b (Cout,)."""
    N, Cin, H, W = x.shape
    Cout = w.shape[1]
    x2 = jnp.transpose(x, (0, 2, 3, 1)).reshape(N * H * W, Cin)
    y2 = matmul_bias_act(x2, w, b, act=act)
    return jnp.transpose(y2.reshape(N, H, W, Cout), (0, 3, 1, 2))


# --------------------------------------------------------------------------
# kernel 2: channels-first LayerNorm + LeakyReLU(0.1)
# --------------------------------------------------------------------------
def _ln_lrelu_kernel(x_ref, w_ref, b_ref, o_ref):
    x = x_ref[...].astype(jnp.float32)
    u = jnp.mean(x, axis=-1, keepdims=True)
    xc = x - u
    s = jnp.mean(xc * xc, axis=-1, keepdims=True)
    y = xc / jnp.sqrt(s + 1e-6)
    y = y * w_ref[...] + b_ref[...]
    y = jnp.where(y > 0, y, 0.1 * y)
    o_ref[...] = y.astype(o_ref.dtype)


def layernorm_cf_lrelu(x, w, b):
    N, C, H, W = x.shape
    x2 = jnp.transpose(x, (0, 2, 3, 1)).reshape(N * H * W, C)
    M = x2.shape[0]
    tm = _row_tile(M, C * x2.dtype.itemsize)
    out = pl.pallas_call(
        _ln_lrelu_kernel,
        out_shape=jax.ShapeDtypeStruct((M, C), x2.dtype),
        grid_spec=pltpu.PrefetchScalarGridSpec(
            num_scalar_prefetch=0,
            grid=(pl.cdiv(M, tm),),
            in_specs=[
                pl.BlockSpec((tm, C), lambda i: (i, 0)),
                pl.BlockSpec((1, C), lambda i: (0, 0)),
                pl.BlockSpec((1, C), lambda i: (0, 0)),
            ],
            out_specs=pl.BlockSpec((tm, C), lambda i: (i, 0)),
        ),
        compiler_params=_cparams(),
    )(x2, w.reshape(1, C), b.reshape(1, C))
    return jnp.transpose(out.reshape(N, H, W, C), (0, 3, 1, 2))


# --------------------------------------------------------------------------
# kernel 3: per-window attention  softmax(q @ k^T) @ v
# --------------------------------------------------------------------------
def _window_attn_kernel(q_ref, k_ref, v_ref, o_ref):
    q = q_ref[...].astype(jnp.float32)
    k = k_ref[...].astype(jnp.float32)
    v = v_ref[...].astype(jnp.float32)
    s = jnp.einsum("bqc,bkc->bqk", q, k, preferred_element_type=jnp.float32)
    m = jnp.max(s, axis=-1, keepdims=True)
    p = jnp.exp(s - m)
    p = p / jnp.sum(p, axis=-1, keepdims=True)
    o = jnp.einsum("bqk,bkc->bqc", p, v, preferred_element_type=jnp.float32)
    o_ref[...] = o.astype(o_ref.dtype)


def window_attention(q, k, v):
    """q, k, v: (BW, L, C) -> (BW, L, C)."""
    BW, L, C = q.shape
    wb = BW if BW <= 2 else min(8, max(1, BW // 2))
    spec = pl.BlockSpec((wb, L, C), lambda i: (i, 0, 0))
    return pl.pallas_call(
        _window_attn_kernel,
        out_shape=jax.ShapeDtypeStruct((BW, L, C), q.dtype),
        grid_spec=pltpu.PrefetchScalarGridSpec(
            num_scalar_prefetch=0,
            grid=(pl.cdiv(BW, wb),),
            in_specs=[spec, spec, spec],
            out_specs=spec,
        ),
        compiler_params=_cparams(),
    )(q, k, v)


# --------------------------------------------------------------------------
# kernel 4: fused  GELU(y) * ca + residual   (per-(n,c) channel scale)
# --------------------------------------------------------------------------
def _gelu_scale_res_kernel(y_ref, ca_ref, r_ref, o_ref):
    y = y_ref[...].astype(jnp.float32)
    # TODO(synk): nn.GELU default is the exact erf form; tanh approximation
    # is used here for guaranteed Mosaic lowering.
    g = jax.nn.gelu(y, approximate=True)
    o_ref[...] = (g * ca_ref[...] + r_ref[...]).astype(o_ref.dtype)


def gelu_scale_residual(y, ca, res):
    """y, res: (N, C, H, W);  ca: (N, C) per-channel scale."""
    N, C, H, W = y.shape
    NC, HW = N * C, H * W
    y2 = y.reshape(NC, HW)
    r2 = res.reshape(NC, HW)
    s2 = ca.reshape(NC, 1).astype(y.dtype)

    # lane-dense output: pad the spatial axis to a multiple of 128
    HWp = ((HW + 127) // 128) * 128
    if HWp != HW:
        pad = ((0, 0), (0, HWp - HW))
        y2 = jnp.pad(y2, pad)
        r2 = jnp.pad(r2, pad)

    tr = _row_tile(NC, HWp * y2.dtype.itemsize)
    out2 = pl.pallas_call(
        _gelu_scale_res_kernel,
        out_shape=jax.ShapeDtypeStruct((NC, HWp), y.dtype),
        grid_spec=pltpu.PrefetchScalarGridSpec(
            num_scalar_prefetch=0,
            grid=(pl.cdiv(NC, tr),),
            in_specs=[
                pl.BlockSpec((tr, HWp), lambda i: (i, 0)),
                pl.BlockSpec((tr, 1), lambda i: (i, 0)),
                pl.BlockSpec((tr, HWp), lambda i: (i, 0)),
            ],
            out_specs=pl.BlockSpec((tr, HWp), lambda i: (i, 0)),
        ),
        compiler_params=_cparams(),
    )(y2, s2, r2)
    if HWp != HW:
        out2 = out2[:, :HW]
    return out2.reshape(N, C, H, W)


# --------------------------------------------------------------------------
# XLA glue (layout / gather / sampling — no clean Pallas equivalent)
# --------------------------------------------------------------------------
def to_windows(x, ws):
    # rearrange 'b c (h dh) (w dw) -> b (h w) (dh dw c)'
    N, C, H, W = x.shape
    Hn, Wn = H // ws, W // ws
    x = x.reshape(N, C, Hn, ws, Wn, ws)
    x = jnp.transpose(x, (0, 2, 4, 3, 5, 1))
    return x.reshape(N, Hn * Wn, ws * ws * C)


def from_windows(xw, ws, C, H, W):
    # rearrange 'b (h w) (dh dw c) -> b c (h dh) (w dw)'
    N = xw.shape[0]
    Hn, Wn = H // ws, W // ws
    x = xw.reshape(N, Hn, Wn, ws, ws, C)
    x = jnp.transpose(x, (0, 5, 1, 3, 2, 4))
    return x.reshape(N, C, H, W)


def flow_warp_bilinear_border(x, flow):
    # TODO(synk): bilinear grid-sample gather left in XLA glue (data-dependent gather).
    N, C, H, W = x.shape
    jj = jnp.arange(W, dtype=x.dtype)[None, None, :]
    ii = jnp.arange(H, dtype=x.dtype)[None, :, None]
    sx = jnp.clip(jj + flow[..., 0], 0.0, W - 1.0)
    sy = jnp.clip(ii + flow[..., 1], 0.0, H - 1.0)
    x0 = jnp.floor(sx)
    y0 = jnp.floor(sy)
    wx1, wy1 = sx - x0, sy - y0
    wx0, wy0 = 1.0 - wx1, 1.0 - wy1
    x0i = jnp.clip(x0.astype(jnp.int32), 0, W - 1)
    y0i = jnp.clip(y0.astype(jnp.int32), 0, H - 1)
    x1i = jnp.clip(x0i + 1, 0, W - 1)
    y1i = jnp.clip(y0i + 1, 0, H - 1)
    flat = x.reshape(N, C, H * W)

    def gather(yi, xi):
        idx = jnp.broadcast_to((yi * W + xi).reshape(N, 1, H * W), (N, C, H * W))
        return jnp.take_along_axis(flat, idx, axis=2).reshape(N, C, H, W)

    v00, v01 = gather(y0i, x0i), gather(y0i, x1i)
    v10, v11 = gather(y1i, x0i), gather(y1i, x1i)
    w00 = (wy0 * wx0)[:, None]
    w01 = (wy0 * wx1)[:, None]
    w10 = (wy1 * wx0)[:, None]
    w11 = (wy1 * wx1)[:, None]
    return v00 * w00 + v01 * w01 + v10 * w10 + v11 * w11


def depthwise3x3(x, w, b, dilation):
    # TODO(synk): depthwise 3x3 convs (conv_sptial) left as XLA 9-tap shifted-sum glue.
    N, C, H, W = x.shape
    p = dilation
    xp = jnp.pad(x, ((0, 0), (0, 0), (p, p), (p, p)))
    out = jnp.zeros_like(x)
    for i in range(3):
        for j in range(3):
            out = out + (
                xp[:, :, i * dilation:i * dilation + H, j * dilation:j * dilation + W]
                * w[None, :, i, j, None, None]
            )
    return out + b[None, :, None, None]


def conv3x3_im2col_sigmoid(x, w, b):
    """Full 3x3 conv (pad 1) as im2col + Pallas matmul + sigmoid."""
    N, Cin, H, W = x.shape
    Cout = w.shape[0]
    xp = jnp.pad(x, ((0, 0), (0, 0), (1, 1), (1, 1)))
    taps = [xp[:, :, i:i + H, j:j + W] for i in range(3) for j in range(3)]
    patches = jnp.stack(taps, axis=2)                              # (N, Cin, 9, H, W)
    patches = jnp.transpose(patches, (0, 3, 4, 1, 2)).reshape(N * H * W, Cin * 9)
    wf = w.reshape(Cout, Cin * 9).T                                # (Cin*9, Cout)
    y = matmul_bias_act(patches, wf, b, act="sigmoid")
    return jnp.transpose(y.reshape(N, H, W, Cout), (0, 3, 1, 2))


# --------------------------------------------------------------------------
# CAMixer forward (training path)
# --------------------------------------------------------------------------
def camixer_forward(params, x, condition_global, gumbel_key, window_size=8):
    N, C, H, W = x.shape
    ws = window_size
    Hn, Wn = H // ws, W // ws
    n_win = Hn * Wn
    L = ws * ws

    # project_v (1x1 conv)
    v = conv1x1(x, params["w_v"], params["b_v"])

    # deformable condition: [v, condition_global, condition_wind]
    lin = jnp.linspace(-1.0, 1.0, ws, dtype=x.dtype)
    g0 = jnp.broadcast_to(lin[:, None], (ws, ws))
    g1 = jnp.broadcast_to(lin[None, :], (ws, ws))
    wind = jnp.tile(jnp.stack([g0, g1], axis=0), (1, Hn, Wn))
    wind = jnp.broadcast_to(wind[None], (N, 2, H, W))
    cond = jnp.concatenate([v, condition_global, wind], axis=1)    # (N, C+4, H, W)

    # ---- PredictorLG ----
    x1 = conv1x1(cond, params["w_in"], params["b_in"])             # (N, cd4, H, W)
    x1 = layernorm_cf_lrelu(x1, params["ln_w"], params["ln_b"])

    offs = conv1x1(x1, params["w_off1"], params["b_off1"], act="lrelu")
    offs = conv1x1(offs, params["w_off2"], params["b_off2"])
    offsets = jnp.tanh(offs) * 8.0                                 # (N, 2, H, W)

    x1_pool = jnp.mean(x1, axis=(2, 3))                            # (N, cd4)
    ca = matmul_bias_act(x1_pool, params["w_ca"], params["b_ca"], act="sigmoid")  # (N, C)

    sa = conv3x3_im2col_sigmoid(x1, params["w_sa"], params["b_sa"])  # (N, 1, H, W)

    xm = jnp.mean(x1, axis=1, keepdims=True)                       # (N, 1, H, W)
    xm_w = to_windows(xm, ws)                                      # (N, n_win, L)
    s = matmul_bias_act(xm_w.reshape(N * n_win, L),
                        params["w_m1"], params["b_m1"], act="lrelu")
    s = matmul_bias_act(s, params["w_m2"], params["b_m2"])
    pred_score = jax.nn.softmax(s.reshape(N, n_win, 2), axis=-1)

    # TODO(synk): hard Gumbel-softmax sampling (stochastic) stays in JAX glue;
    # inference-path data-dependent top-k routing (dynamic shapes) not implemented.
    g = jax.random.gumbel(gumbel_key, pred_score.shape, dtype=pred_score.dtype)
    hard_idx = jnp.argmax(pred_score + g, axis=-1)
    mask = (hard_idx == 0).astype(x.dtype)[..., None]              # (N, n_win, 1)

    # ---- q / k / v ----
    q = x
    k = x + flow_warp_bilinear_border(x, jnp.transpose(offsets, (0, 2, 3, 1)))
    qk = jnp.concatenate([q, k], axis=1)                           # (N, 2C, H, W)
    vs = v * sa

    v_w = to_windows(v, ws)
    vs_w = to_windows(vs, ws)
    qk_w = to_windows(qk, ws)

    v1 = (v_w * mask).reshape(N * n_win, L, C)
    v2 = vs_w * (1.0 - mask)
    qk1 = (qk_w * mask).reshape(N, n_win * L, 2 * C)
    q1 = qk1[..., :C].reshape(N * n_win * L, C)
    k1 = qk1[..., C:].reshape(N * n_win * L, C)
    q1 = matmul_bias_act(q1, params["w_q"], params["b_q"]).reshape(N * n_win, L, C)
    k1 = matmul_bias_act(k1, params["w_k"], params["b_k"]).reshape(N * n_win, L, C)

    f_attn = window_attention(q1, k1, v1).reshape(N, n_win, L * C)

    attn_out = from_windows(f_attn + v2, ws, C, H, W)              # (N, C, H, W)

    # conv_sptial (two depthwise 3x3) + fused GELU * ca + residual
    y = depthwise3x3(attn_out, params["w_d1"], params["b_d1"], dilation=1)
    y = depthwise3x3(y, params["w_d2"], params["b_d2"], dilation=2)
    out = gelu_scale_residual(y, ca, attn_out)

    out = conv1x1(out, params["w_out"], params["b_out"])
    return out, jnp.mean(mask, axis=1)


camixer_forward_jit = jax.jit(camixer_forward, static_argnames=("window_size",))


# --------------------------------------------------------------------------
# deterministic parameter init (weights stored pre-transposed as (Cin, Cout))
# --------------------------------------------------------------------------
def init_camixer_params(key, dim, window_size=8):
    ws = window_size
    cdim = dim + 4
    cd4 = cdim // 4
    cd8 = cdim // 8
    ks = jax.random.split(key, 13)

    def w(k, shape, scale=0.05):
        return scale * jax.random.normal(k, shape, jnp.float32)

    def zeros(n):
        return jnp.zeros((n,), jnp.float32)

    return {
        "w_v": w(ks[0], (dim, dim)), "b_v": zeros(dim),
        "w_in": w(ks[1], (cdim, cd4)), "b_in": zeros(cd4),
        "ln_w": jnp.ones((cd4,), jnp.float32), "ln_b": zeros(cd4),
        "w_off1": w(ks[2], (cd4, cd8)), "b_off1": zeros(cd8),
        "w_off2": w(ks[3], (cd8, 2)), "b_off2": zeros(2),
        "w_ca": w(ks[4], (cd4, dim)), "b_ca": zeros(dim),
        "w_sa": w(ks[5], (1, cd4, 3, 3)), "b_sa": zeros(1),
        "w_m1": w(ks[6], (ws * ws, ws)), "b_m1": zeros(ws),
        "w_m2": w(ks[7], (ws, 2)), "b_m2": zeros(2),
        "w_q": w(ks[8], (dim, dim)), "b_q": zeros(dim),
        "w_k": w(ks[9], (dim, dim)), "b_k": zeros(dim),
        "w_d1": w(ks[10], (dim, 3, 3)), "b_d1": zeros(dim),
        "w_d2": w(ks[11], (dim, 3, 3)), "b_d2": zeros(dim),
        "w_out": w(ks[12], (dim, dim)), "b_out": zeros(dim),
    }


if __name__ == "__main__":
    N, dim, H, W = 2, 32, 16, 16
    ws = 8

    root = jax.random.PRNGKey(0)
    k_param, k_x, k_cond, k_gumbel, k_t1, k_t2, k_t3 = jax.random.split(root, 7)

    params = init_camixer_params(k_param, dim, ws)
    x = jax.random.normal(k_x, (N, dim, H, W), jnp.float32)
    cond_global = jax.random.normal(k_cond, (N, 2, H, W), jnp.float32)

    # --- kernel sanity checks against high-precision XLA references ---
    xa = jax.random.normal(k_t1, (40, 36), jnp.float32)
    wa = 0.1 * jax.random.normal(k_t2, (36, 9), jnp.float32)
    ba = 0.1 * jax.random.normal(k_t3, (9,), jnp.float32)
    yref = jnp.dot(xa, wa, precision=jax.lax.Precision.HIGHEST) + ba
    yref = jnp.where(yref > 0, yref, 0.1 * yref)
    ygot = matmul_bias_act(xa, wa, ba, act="lrelu")
    assert jnp.allclose(ygot, yref, atol=1e-3, rtol=1e-3)

    qt = 0.1 * jax.random.normal(k_t1, (4, 64, 32), jnp.float32)
    kt = 0.1 * jax.random.normal(k_t2, (4, 64, 32), jnp.float32)
    vt = jax.random.normal(k_t3, (4, 64, 32), jnp.float32)
    sref = jnp.einsum("bqc,bkc->bqk", qt, kt, precision=jax.lax.Precision.HIGHEST)
    aref = jnp.einsum("bqk,bkc->bqc", jax.nn.softmax(sref, axis=-1), vt,
                      precision=jax.lax.Precision.HIGHEST)
    agot = window_attention(qt, kt, vt)
    assert jnp.allclose(agot, aref, atol=1e-3, rtol=1e-3)

    # --- full CAMixer forward (training path) ---
    out, aux = camixer_forward_jit(params, x, cond_global, k_gumbel, window_size=ws)
    out = jax.block_until_ready(out)

    assert out.shape == (N, dim, H, W)
    assert aux.shape == (N, 1)
    assert bool(jnp.all(jnp.isfinite(out)))

    print("KERNEL_OK")
</pallas_src>

<mosaic_0001>
module attributes {stable_mosaic.version = 11 : i64} {
  func.func @_matmul_bias_act_kernel(%arg0: i32, %arg1: memref<16x36xf32, #tpu.memory_space<vmem>>, %arg2: memref<36x9xf32, #tpu.memory_space<vmem>>, %arg3: memref<1x9xf32, #tpu.memory_space<vmem>>, %arg4: memref<16x9xf32, #tpu.memory_space<vmem>>) attributes {dimension_semantics = [#tpu.dimension_semantics<parallel>], iteration_bounds = array<i64: 3>, scalar_prefetch = 0 : i64, scratch_operands = 0 : i64, tpu.core_type = #tpu.core_type<tc>, window_params = [{transform_indices = @transform_0, window_bounds = array<i64: 16, 36>}, {pipeline_mode = #tpu.pipeline_mode<synchronous>, transform_indices = @transform_1, window_bounds = array<i64: 36, 9>}, {pipeline_mode = #tpu.pipeline_mode<synchronous>, transform_indices = @transform_2, window_bounds = array<i64: 1, 9>}, {transform_indices = @transform_3, window_bounds = array<i64: 16, 9>}]} {
    %c0 = arith.constant 0 : index
    %c0_0 = arith.constant 0 : index
    %0 = vector.load %arg1[%c0, %c0_0] : memref<16x36xf32, #tpu.memory_space<vmem>>, vector<16x36xf32>
    %c0_1 = arith.constant 0 : index
    %c0_2 = arith.constant 0 : index
    %1 = vector.load %arg2[%c0_1, %c0_2] : memref<36x9xf32, #tpu.memory_space<vmem>>, vector<36x9xf32>
    %cst = arith.constant dense<0.000000e+00> : vector<16x9xf32>
    %2 = tpu.matmul %0, %1, %cst {dimension_numbers = #tpu.dot_dimension_numbers<[1], [0], [0], [1], [0, 0, 1, 1], [], []>} : vector<16x36xf32>, vector<36x9xf32>, vector<16x9xf32> -> vector<16x9xf32>
    %c0_3 = arith.constant 0 : index
    %c0_4 = arith.constant 0 : index
    %3 = vector.load %arg3[%c0_3, %c0_4] : memref<1x9xf32, #tpu.memory_space<vmem>>, vector<1x9xf32>
    %4 = vector.broadcast %3 : vector<1x9xf32> to vector<16x9xf32>
    %5 = arith.addf %2, %4 : vector<16x9xf32>
    %cst_5 = arith.constant 0.000000e+00 : f32
    %6 = vector.broadcast %cst_5 : f32 to vector<16x9xf32>
    %7 = arith.cmpf ogt, %5, %6 : vector<16x9xf32>
    %cst_6 = arith.constant 1.000000e-01 : f32
    %8 = vector.broadcast %cst_6 : f32 to vector<16x9xf32>
    %9 = arith.mulf %8, %5 : vector<16x9xf32>
    %10 = arith.select %7, %5, %9 : vector<16x9xi1>, vector<16x9xf32>
    %c0_7 = arith.constant 0 : index
    %c0_8 = arith.constant 0 : index
    %11 = vector.load %arg4[%c0_7, %c0_8] : memref<16x9xf32, #tpu.memory_space<vmem>>, vector<16x9xf32>
    tpu.vector_store %arg4[%c0_7, %c0_8], %10 {strides = array<i32>} : memref<16x9xf32, #tpu.memory_space<vmem>>, vector<16x9xf32>,
    return
  }
  func.func @transform_0(%arg0: i32) -> (i32, i32) {
    %c0_i32 = arith.constant 0 : i32
    %c0_i32_0 = arith.constant 0 : i32
    return %arg0, %c0_i32 : i32, i32
  }
  func.func @transform_1(%arg0: i32) -> (i32, i32) {
    %c0_i32 = arith.constant 0 : i32
    %c0_i32_0 = arith.constant 0 : i32
    %c0_i32_1 = arith.constant 0 : i32
    return %c0_i32, %c0_i32_0 : i32, i32
  }
  func.func @transform_2(%arg0: i32) -> (i32, i32) {
    %c0_i32 = arith.constant 0 : i32
    %c0_i32_0 = arith.constant 0 : i32
    %c0_i32_1 = arith.constant 0 : i32
    return %c0_i32, %c0_i32_0 : i32, i32
  }
  func.func @transform_3(%arg0: i32) -> (i32, i32) {
    %c0_i32 = arith.constant 0 : i32
    %c0_i32_0 = arith.constant 0 : i32
    return %arg0, %c0_i32 : i32, i32
  }
}

</mosaic_0001>

<llo_original>
// kernel: tpu_custom_call.1
$region0: #{tpu_custom_call.1}
  #allocation0 [shape = 'u32[]', space=smem, size = 0x4, offset = 0x4, fixed_abs, tag = 'smem constant byte address 0x4 - core index']
  #allocation1 [shape = 'u32[144,128]{1,0:T(1,128)}', space=vmem, size = 0x12000, scoped, tag = 'internal scratch']
  %s0 = inlined_call_operand.vmem [shape: f32[40,36], index: 0, kind: input, shape index: {}]
  %s1 = inlined_call_operand.vmem [shape: f32[36,9], index: 1, kind: input, shape index: {}]
  %s2 = inlined_call_operand.vmem [shape: f32[1,9], index: 2, kind: input, shape index: {}]
  %s3 = inlined_call_operand.vmem [shape: f32[40,9], index: 3, kind: output, shape index: {}]
  %s4 = sld [smem:[#allocation0]]
  $region93: #{tpu_custom_call.1} parent=0
    _
  %s6 = ssub.s32 1, %s4
  %s7 = scalar_select 0, %s6, %s4
  $region1: #{tpu_custom_call.1} parent=0
    #allocation2 [shape = 'u8[16384]{0}', space=vmem, size = 0x4000, scoped, tag = 'output window, operand 0']
    loop: start=0, step=1, limit=5
    $region2: #{tpu_custom_call.1} parent=1 // loop_pre_header
      _
    $region3: #{tpu_custom_call.1} parent=1 // loop_header
      %s9 = sphi 0, %s13
      %p10 = scmp.ge.s32.totalorder %s9, 5
      %s19 = sphi 0, %s21
      %s22 = sphi 0, %s19
      %s23 = sphi 0, %s22
      %s39 = sphi 0, %s23
      %s43 = sphi 0, %s43
      %s45 = sphi 0, %s43
      %s46 = sphi 0, %s45
      %s60 = sphi 0, %s46
      %s64 = sphi 0, %s64
      %s66 = sphi 0, %s64
      %s67 = sphi 0, %s66
      %s81 = sphi 0, %s67
      %s87 = sphi 0, %s89
      %s90 = sphi 0, %s87
      %s91 = sphi 0, %s90
      %s107 = sphi 0, %s91
    $region4: #{tpu_custom_call.1} parent=1 // loop_header_branch
      %12 = sbr.rel (%p10) target = $region8
    $region5: #{tpu_custom_call.1} parent=1 // loop_body
      %s14 = ssub.s32 %s9, 1
      %s15 = ssub.s32 %s9, 2
      %s16 = sadd.s32 %s9, 1
      %s17 = ssub.s32 %s9, %s16
      %p18 = scmp.eq.s32.totalorder %s17, 0
      %s20 = sadd.s32 %s19, 1
      %s21 = scalar_select %p18, %s19, %s20
      %p24 = pneg %p18
      %p25 = scmp.eq.s32.totalorder %s9, 2
      %p26 = por %p24, %p25
      %p27 = scmp.ne.s32.totalorder %s19, %s22
      %p28 = scmp.eq.s32.totalorder %s9, 0
      %p29 = por %p27, %p28
      %p30 = scmp.ne.s32.totalorder %s19, %s22
      %p31 = scmp.eq.s32.totalorder %s14, 2
      %p32 = por %p30, %p31
      %p33 = scmp.ne.s32.totalorder %s22, %s23
      %p34 = scmp.eq.s32.totalorder %s14, 0
      %p35 = por %p33, %p34
      %p36 = scmp.ne.s32.totalorder %s22, %s23
      %p37 = scmp.eq.s32.totalorder %s15, 2
      %p38 = por %p36, %p37
      %p40 = scmp.ne.s32.totalorder %s23, %s39
      %p41 = scmp.eq.s32.totalorder %s15, 0
      %p42 = por %p40, %p41
      %s44 = sadd.s32 %s43, 1
      %p47 = scmp.eq.s32.totalorder %s9, 2
      %p48 = scmp.ne.s32.totalorder %s43, %s45
      %p49 = scmp.eq.s32.totalorder %s9, 0
      %p50 = por %p48, %p49
      %p51 = scmp.ne.s32.totalorder %s43, %s45
      %p52 = scmp.eq.s32.totalorder %s14, 2
      %p53 = por %p51, %p52
      %p54 = scmp.ne.s32.totalorder %s45, %s46
      %p55 = scmp.eq.s32.totalorder %s14, 0
      %p56 = por %p54, %p55
      %p57 = scmp.ne.s32.totalorder %s45, %s46
      %p58 = scmp.eq.s32.totalorder %s15, 2
      %p59 = por %p57, %p58
      %p61 = scmp.ne.s32.totalorder %s46, %s60
      %p62 = scmp.eq.s32.totalorder %s15, 0
      %p63 = por %p61, %p62
      %s65 = sadd.s32 %s64, 1
      %p68 = scmp.eq.s32.totalorder %s9, 2
      %p69 = scmp.ne.s32.totalorder %s64, %s66
      %p70 = scmp.eq.s32.totalorder %s9, 0
      %p71 = por %p69, %p70
      %p72 = scmp.ne.s32.totalorder %s64, %s66
      %p73 = scmp.eq.s32.totalorder %s14, 2
      %p74 = por %p72, %p73
      %p75 = scmp.ne.s32.totalorder %s66, %s67
      %p76 = scmp.eq.s32.totalorder %s14, 0
      %p77 = por %p75, %p76
      %p78 = scmp.ne.s32.totalorder %s66, %s67
      %p79 = scmp.eq.s32.totalorder %s15, 2
      %p80 = por %p78, %p79
      %p82 = scmp.ne.s32.totalorder %s67, %s81
      %p83 = scmp.eq.s32.totalorder %s15, 0
      %p84 = por %p82, %p83
      %s85 = ssub.s32 %s9, %s16
      %p86 = scmp.eq.s32.totalorder %s85, 0
      %s88 = sadd.s32 %s87, 1
      %s89 = scalar_select %p86, %s87, %s88
      %p92 = pneg %p86
      %p93 = scmp.eq.s32.totalorder %s9, 2
      %p94 = por %p92, %p93
      %p95 = scmp.ne.s32.totalorder %s87, %s90
      %p96 = scmp.eq.s32.totalorder %s9, 0
      %p97 = por %p95, %p96
      %p98 = scmp.ne.s32.totalorder %s87, %s90
      %p99 = scmp.eq.s32.totalorder %s14, 2
      %p100 = por %p98, %p99
      %p101 = scmp.ne.s32.totalorder %s90, %s91
      %p102 = scmp.eq.s32.totalorder %s14, 0
      %p103 = por %p101, %p102
      %p104 = scmp.ne.s32.totalorder %s90, %s91
      %p105 = scmp.eq.s32.totalorder %s15, 2
      %p106 = por %p104, %p105
      %p108 = scmp.ne.s32.totalorder %s91, %s107
      %p109 = scmp.eq.s32.totalorder %s15, 0
      %p110 = por %p108, %p109
      %p111 = scmp.le.s32.totalorder 1, %s9
      %p112 = scmp.lt.s32.totalorder %s9, 4
      %p113 = pnand %p111, %p112
      %p114 = pneg %p113
      // Predicated region
      $region9: #{tpu_custom_call.1} parent=5 // pred_check
        _
      $region10: #{tpu_custom_call.1} parent=5 // pred_check_branch
        %116 = sbr.rel (%p113) target = $region12
      $region11: #{tpu_custom_call.1} parent=5 // pred_region
        %s117 = ssub.s32 %s9, 1
        // Predicated region
        $region13: #{tpu_custom_call.1} parent=11 // pred_check
          %p118 = pneg %p56
        $region14: #{tpu_custom_call.1} parent=11 // pred_check_branch
          %120 = sbr.rel (%p118) target = $region16
        $region15: #{tpu_custom_call.1} parent=11 // pred_region
          _
        $region16: #{tpu_custom_call.1} parent=11 // pred_fallthru
          _
        // Predicated region
        $region17: #{tpu_custom_call.1} parent=11 // pred_check
          %p121 = pneg %p77
        $region18: #{tpu_custom_call.1} parent=11 // pred_check_branch
          %123 = sbr.rel (%p121) target = $region20
        $region19: #{tpu_custom_call.1} parent=11 // pred_region
          _
        $region20: #{tpu_custom_call.1} parent=11 // pred_fallthru
          _
      $region12: #{tpu_custom_call.1} parent=5 // pred_fallthru
        _
      %p124 = scmp.lt.s32.totalorder %s9, 3
      // Predicated region
      $region21: #{tpu_custom_call.1} parent=5 // pred_check
        %p125 = pneg %p124
      $region22: #{tpu_custom_call.1} parent=5 // pred_check_branch
        %127 = sbr.rel (%p125) target = $region24
      $region23: #{tpu_custom_call.1} parent=5 // pred_region
        // Predicated region
        $region25: #{tpu_custom_call.1} parent=23 // pred_check
          %p128 = pneg %p29
        $region26: #{tpu_custom_call.1} parent=23 // pred_check_branch
          %130 = sbr.rel (%p128) target = $region28
        $region27: #{tpu_custom_call.1} parent=23 // pred_region
          %s131 = smul.u32 2, %s9
          %s132 = ssub.s32 5, %s131
          %p133 = scmp.lt.s32.totalorder %s132, 2
          %s134 = scalar_select %p133, %s132, 2
          %s135 = smul.u32 128, %s134
          %p136 = scmp.lt.s32.totalorder %s131, 4
          %s137 = scalar_select %p136, %s131, 4
          %s138 = smul.addr %s137, 8
          %s139 = scalar_lea.vmem %s0, %s138
          %s140 = smul.u32 2, %s9
          %s141 = ssub.s32 5, %s140
          %p142 = scmp.lt.s32.totalorder %s141, 2
          %s143 = scalar_select %p142, %s141, 2
          %s144 = smul.u32 128, %s143
        $region28: #{tpu_custom_call.1} parent=23 // pred_fallthru
          _
      $region24: #{tpu_custom_call.1} parent=5 // pred_fallthru
        _
      %p145 = scmp.le.s32.totalorder 1, %s9
      %p146 = scmp.lt.s32.totalorder %s9, 4
      %p147 = pnand %p145, %p146
      %p148 = pneg %p147
      // Predicated region
      $region29: #{tpu_custom_call.1} parent=5 // pred_check
        _
      $region30: #{tpu_custom_call.1} parent=5 // pred_check_branch
        %150 = sbr.rel (%p147) target = $region32
      $region31: #{tpu_custom_call.1} parent=5 // pred_region
        %s151 = ssub.s32 %s9, 1
        %s152 = smul.u32 2, %s14
        %s153 = ssub.s32 5, %s152
        %p154 = scmp.lt.s32.totalorder %s153, 2
        %s155 = scalar_select %p154, %s153, 2
        %s156 = smul.u32 128, %s155
        %p157 = scmp.lt.s32.totalorder %s152, 4
        %s158 = scalar_select %p157, %s152, 4
        %s159 = smul.addr %s158, 8
        %s160 = scalar_lea.vmem %s0, %s159
        %p161 = pneg %p35
        %p162 = pneg %p32
        %p163 = pneg %p56
        %p164 = pneg %p53
        %p165 = pneg %p77
        %p166 = pneg %p74
        %p167 = pneg %p103
        %p168 = pneg %p100
        %s169 = sand.u32 %s90, 1
        %s170 = sand.u32 %s90, 1
        %s171 = smul.addr %s170, 16
        %s172 = scalar_lea.vmem [#allocation2], %s171
        %s173 = smul.u32 2, %s14
        %s174 = ssub.s32 5, %s173
        %p175 = scmp.lt.s32.totalorder %s174, 2
        %s176 = scalar_select %p175, %s174, 2
        %s177 = smul.u32 128, %s176
        %p178 = scmp.lt.s32.totalorder %s173, 4
        %s179 = scalar_select %p178, %s173, 4
        %s180 = smul.addr %s179, 8
        %s181 = scalar_lea.vmem %s0, %s180
        %s182 = smul.u32 2, %s14
        %s183 = ssub.s32 5, %s182
        %p184 = scmp.lt.s32.totalorder %s183, 2
        %s185 = scalar_select %p184, %s183, 2
        %s186 = smul.u32 128, %s185
        %s187 = smul.u32 2, %s14
        %s188 = ssub.s32 5, %s187
        %p189 = scmp.lt.s32.totalorder %s188, 2
        %s190 = scalar_select %p189, %s188, 2
        %s191 = smul.u32 128, %s190
        %v192 = vld [vmem:[%s181] sm:$0xff]
        %v193 = vld [vmem:[%s181 + $0x8] sm:$0xff]
        %v194 = vld [vmem:[%s1] sm:$0xff]
        %v195 = vld [vmem:[%s1 + $0x8] sm:$0xff]
        %v196 = vld [vmem:[%s1 + $0x10] sm:$0xff]
        %v197 = vld [vmem:[%s1 + $0x18] sm:$0xff]
        %v198 = vld [vmem:[%s1 + $0x20] sm:$0xf]
        %v199 = vld [vmem:[%s2] sm:$0x1]
        %v201 = vlaneseq
        %v202 = vshrl.u32 %v201, 7
        %v203 = vsub.s32 0, %v202
        %v204 = vrot.slane %v199, %v203
        %vm206 = vcmask 293888
        %v208 = vsel %vm206, %v192, 0
        %v211 = vsel %vm206, %v193, 0
        %vm213 = vcmask 1043456
        %v215 = vsel %vm213, %v198, 0
        %217 = vmatprep.subr.mxu0 0.0
        %218 = vmatpush1.msra.mxu0 0.0
        %219 = vmatprep.subr.mxu0 0.0
        %220 = vmatpush1.msra.mxu0 0.0
        %221 = vmatprep.subr.mxu0 0.0
        %222 = vmatpush1.msra.mxu0 0.0
        %223 = vmatprep.subr.mxu0 0.0
        %224 = vmatpush1.msra.mxu0 0.0
        %225 = vmatprep.subr.mxu0 0.0
        %226 = vmatpush1.msra.mxu0 0.0
        %227 = vmatprep.subr.mxu0 0.0
        %228 = vmatpush1.msra.mxu0 0.0
        %229 = vmatprep.subr.mxu0 0.0
        %230 = vmatpush1.msra.mxu0 0.0
        %231 = vmatprep.subr.mxu0 0.0
        %232 = vmatpush1.msra.mxu0 0.0
        %233 = vmatprep.subr.mxu0 0.0
        %234 = vmatpush1.msra.mxu0 0.0
        %235 = vmatprep.subr.mxu0 0.0
        %236 = vmatpush1.msra.mxu0 0.0
        %237 = vmatprep.subr.mxu0 0.0
        %238 = vmatpush1.msra.mxu0 0.0
        %239 = vmatprep.subr.mxu0 0.0
        %240 = vmatpush1.msra.mxu0 %v215
        %241 = vmatprep.subr.mxu0 0.0
        %242 = vmatpush1.msra.mxu0 %v197
        %243 = vmatprep.subr.mxu0 0.0
        %244 = vmatpush1.msra.mxu0 %v196
        %245 = vmatprep.subr.mxu0 0.0
        %246 = vmatpush1.msra.mxu0 %v195
        %247 = vmatprep.subr.mxu0 0.0
        %248 = vmatpush1.msra.mxu0 %v194
        %249 = vmatprep.subr.mxu0 0.0
        %250 = vmatpush2.msra.mxu0 0.0
        %251 = vmatprep.subr.mxu0 0.0
        %252 = vmatpush2.msra.mxu0 0.0
        %253 = vmatprep.subr.mxu0 0.0
        %254 = vmatpush2.msra.mxu0 0.0
        %255 = vmatprep.subr.mxu0 0.0
        %256 = vmatpush2.msra.mxu0 0.0
        %257 = vmatprep.subr.mxu0 0.0
        %258 = vmatpush2.msra.mxu0 0.0
        %259 = vmatprep.subr.mxu0 0.0
        %260 = vmatpush2.msra.mxu0 0.0
        %261 = vmatprep.subr.mxu0 0.0
        %262 = vmatpush2.msra.mxu0 0.0
        %263 = vmatprep.subr.mxu0 0.0
        %264 = vmatpush2.msra.mxu0 0.0
        %265 = vmatprep.subr.mxu0 0.0
        %266 = vmatpush2.msra.mxu0 0.0
        %267 = vmatprep.subr.mxu0 0.0
        %268 = vmatpush2.msra.mxu0 0.0
        %269 = vmatprep.subr.mxu0 0.0
        %270 = vmatpush2.msra.mxu0 0.0
        %271 = vmatprep.subr.mxu0 0.0
        %272 = vmatpush2.msra.mxu0 0.0
        %273 = vmatprep.subr.mxu0 0.0
        %274 = vmatpush2.msra.mxu0 0.0
        %275 = vmatprep.subr.mxu0 0.0
        %276 = vmatpush2.msra.mxu0 0.0
        %277 = vmatprep.subr.mxu0 0.0
        %278 = vmatpush2.msra.mxu0 0.0
        %279 = vmatprep.subr.mxu0 0.0
        %280 = vmatpush2.msra.mxu0 0.0
        %281 = vmatprep.mubr.f32.mxu0 0.0
        %282 = vmatmul.mubr.f32.gmra.mxu0 %v208
        %v283 = vpop.f32.mrf.mxu0
        %v284 = vadd.f32 %v204, %v283
        %v285 = vpop.f32.mrf.mxu0
        %286 = vmatprep.mubr.f32.mxu0 0.0
        %287 = vmatmul.mubr.f32.gmra.mxu0 %v211
        %v288 = vpop.f32.mrf.mxu0
        %v289 = vadd.f32 %v204, %v288
        %v290 = vpop.f32.mrf.mxu0
        %291 = vdwg.mxu0
        %vm292 = vcmp.gt.f32.partialorder %v284, 0.0
        %vm293 = vcmp.gt.f32.partialorder %v289, 0.0
        %v294 = vmul.f32 %v284, 0.1
        %v295 = vmul.f32 %v289, 0.1
        %v296 = vsel %vm292, %v284, %v294
        %v297 = vsel %vm293, %v289, %v295
        %vm298 = vcmask 72704
        %299 = vst.msk [vmem:[%s172] sm:$0xff] %vm298, %v296
        %300 = vst.msk [vmem:[%s172 + $0x8] sm:$0xff] %vm298, %v297
        %s301 = sand.u32 %s90, 1
        %s302 = sand.u32 %s90, 1
        %s303 = smul.addr %s302, 16
        %s304 = scalar_lea.vmem [#allocation2], %s303
        // Predicated region
        $region33: #{tpu_custom_call.1} parent=31 // pred_check
          %p305 = pneg %p100
        $region34: #{tpu_custom_call.1} parent=31 // pred_check_branch
          %307 = sbr.rel (%p305) target = $region36
        $region35: #{tpu_custom_call.1} parent=31 // pred_region
          %s308 = smul.u32 2, %s14
          %s309 = ssub.s32 5, %s308
          %p310 = scmp.lt.s32.totalorder %s309, 2
          %s311 = scalar_select %p310, %s309, 2
          %s312 = smul.u32 128, %s311
          %p313 = scmp.ne.s32.totalorder 0, %s312
          %s314 = smul.addr %s308, 8
          %s315 = scalar_lea.vmem %s3, %s314
          // Predicated region
          $region37: #{tpu_custom_call.1} parent=35 // pred_check
            %p316 = pneg %p313
          $region38: #{tpu_custom_call.1} parent=35 // pred_check_branch
            %318 = sbr.rel (%p316) target = $region40
          $region39: #{tpu_custom_call.1} parent=35 // pred_region
            // Predicated region
            $region41: #{tpu_custom_call.1} parent=39 // pred_check
              _
            $region42: #{tpu_custom_call.1} parent=39 // pred_check_branch
              %320 = sbr.rel (0) target = $region44
            $region43: #{tpu_custom_call.1} parent=39 // pred_region
              // Predicated region
              $region63: #{tpu_custom_call.1} parent=43 // pred_check
                _
              $region64: #{tpu_custom_call.1} parent=43 // pred_check_branch
                %372 = sbr.rel (0) target = $region66
              $region65: #{tpu_custom_call.1} parent=43 // pred_region
                %s373 = sshrl.u32 %s311, 1
                // While loop
                $region67: #{tpu_custom_call.1} parent=65 // loop_pre_header
                  _
                $region68: #{tpu_custom_call.1} parent=65 // loop_header
                  %s375 = sphi 0, %s377
                  %p376 = scmp.ge.s32.totalorder %s375, %s373
                  %s380 = sphi 0, %s389
                  %s381 = sphi %s304, %s392
                  %s382 = sphi %s315, %s393
                $region69: #{tpu_custom_call.1} parent=65 // loop_header_branch
                  %379 = sbr.rel (%p376) target = $region73
                $region70: #{tpu_custom_call.1} parent=65 // loop_body
                  %v383 = vld [vmem:[%s381] sm:$0xff]
                  %384 = vst [vmem:[%s382] sm:$0xff] %v383
                  %v385 = vld [vmem:[%s381 + $0x8] sm:$0xff]
                  %386 = vst [vmem:[%s382 + $0x8] sm:$0xff] %v385
                  %s387 = sadd.s32 1, %s380
                  %p388 = scmp.ge.s32.totalorder %s387, %s373
                  %s389 = scalar_select %p388, 0, %s387
                  %s390 = smul.u32 %s389, 16
                  %s391 = smul.u32 %s389, 16
                  %s392 = scalar_lea.vmem %s304, %s390 [#allocation2]
                  %s393 = scalar_lea.vmem %s315, %s391
                $region71: #{tpu_custom_call.1} parent=65 // loop_footer
                  %s377 = sadd.s32 %s375, 1
                $region72: #{tpu_custom_call.1} parent=65 // loop_footer_branch
                  %374 = sbr.rel target = $region68
                $region73: #{tpu_custom_call.1} parent=65 // loop_exit
                  _
                %s394 = sshrl.u32 %s311, 1
                %s395 = sand.u32 %s311, 1
                %s396 = smul.u32 %s394, 2
                %s397 = smul.u32 8, %s396
                %s398 = scalar_lea.vmem %s304, %s397 [#allocation2]
                %s399 = smul.u32 8, %s396
                %s400 = scalar_lea.vmem %s315, %s399
                // While loop
                $region74: #{tpu_custom_call.1} parent=65 // loop_pre_header
                  _
                $region75: #{tpu_custom_call.1} parent=65 // loop_header
                  %s402 = sphi 0, %s404
                  %p403 = scmp.ge.s32.totalorder %s402, %s395
                  %s407 = sphi 0, %s414
                  %s408 = sphi %s398, %s417
                  %s409 = sphi %s400, %s418
                $region76: #{tpu_custom_call.1} parent=65 // loop_header_branch
                  %406 = sbr.rel (%p403) target = $region80
                $region77: #{tpu_custom_call.1} parent=65 // loop_body
                  %v410 = vld [vmem:[%s408] sm:$0xff]
                  %411 = vst [vmem:[%s409] sm:$0xff] %v410
                  %s412 = sadd.s32 1, %s407
                  %p413 = scmp.ge.s32.totalorder %s412, %s395
                  %s414 = scalar_select %p413, 0, %s412
                  %s415 = smul.u32 %s414, 8
                  %s416 = smul.u32 %s414, 8
                  %s417 = scalar_lea.vmem %s398, %s415 [#allocation2]
                  %s418 = scalar_lea.vmem %s400, %s416
                $region78: #{tpu_custom_call.1} parent=65 // loop_footer
                  %s404 = sadd.s32 %s402, 1
                $region79: #{tpu_custom_call.1} parent=65 // loop_footer_branch
                  %401 = sbr.rel target = $region75
                $region80: #{tpu_custom_call.1} parent=65 // loop_exit
                  _
              $region66: #{tpu_custom_call.1} parent=43 // pred_fallthru
                _
              // Predicated region
              $region81: #{tpu_custom_call.1} parent=43 // pred_check
                _
              $region82: #{tpu_custom_call.1} parent=43 // pred_check_branch
                %420 = sbr.rel target = $region84
              $region83: #{tpu_custom_call.1} parent=43 // pred_region
                _
              $region84: #{tpu_custom_call.1} parent=43 // pred_fallthru
                _
            $region44: #{tpu_custom_call.1} parent=39 // pred_fallthru
              _
            // Predicated region
            $region45: #{tpu_custom_call.1} parent=39 // pred_check
              _
            $region46: #{tpu_custom_call.1} parent=39 // pred_check_branch
              %322 = sbr.rel target = $region48
            $region47: #{tpu_custom_call.1} parent=39 // pred_region
              %s324 = ssub.s32 256, 1
              %s325 = sshrl.u32 %s311, 1
              // While loop
              $region49: #{tpu_custom_call.1} parent=47 // loop_pre_header
                _
              $region50: #{tpu_custom_call.1} parent=47 // loop_header
                %s327 = sphi 0, %s329
                %p328 = scmp.ge.s32.totalorder %s327, %s325
                %s332 = sphi 0, %s341
                %s333 = sphi %s304, %s344
                %s334 = sphi %s315, %s345
              $region51: #{tpu_custom_call.1} parent=47 // loop_header_branch
                %331 = sbr.rel (%p328) target = $region55
              $region52: #{tpu_custom_call.1} parent=47 // loop_body
                %v335 = vld [vmem:[%s333] sm:%s324]
                %336 = vst [vmem:[%s334] sm:%s324] %v335
                %v337 = vld [vmem:[%s333 + $0x8] sm:%s324]
                %338 = vst [vmem:[%s334 + $0x8] sm:%s324] %v337
                %s339 = sadd.s32 1, %s332
                %p340 = scmp.ge.s32.totalorder %s339, %s325
                %s341 = scalar_select %p340, 0, %s339
                %s342 = smul.u32 %s341, 16
                %s343 = smul.u32 %s341, 16
                %s344 = scalar_lea.vmem %s304, %s342 [#allocation2]
                %s345 = scalar_lea.vmem %s315, %s343
              $region53: #{tpu_custom_call.1} parent=47 // loop_footer
                %s329 = sadd.s32 %s327, 1
              $region54: #{tpu_custom_call.1} parent=47 // loop_footer_branch
                %326 = sbr.rel target = $region50
              $region55: #{tpu_custom_call.1} parent=47 // loop_exit
                _
              %s346 = sshrl.u32 %s311, 1
              %s347 = sand.u32 %s311, 1
              %s348 = smul.u32 %s346, 2
              %s349 = smul.u32 8, %s348
              %s350 = scalar_lea.vmem %s304, %s349 [#allocation2]
              %s351 = smul.u32 8, %s348
              %s352 = scalar_lea.vmem %s315, %s351
              // While loop
              $region56: #{tpu_custom_call.1} parent=47 // loop_pre_header
                _
              $region57: #{tpu_custom_call.1} parent=47 // loop_header
                %s354 = sphi 0, %s356
                %p355 = scmp.ge.s32.totalorder %s354, %s347
                %s359 = sphi 0, %s366
                %s360 = sphi %s350, %s369
                %s361 = sphi %s352, %s370
              $region58: #{tpu_custom_call.1} parent=47 // loop_header_branch
                %358 = sbr.rel (%p355) target = $region62
              $region59: #{tpu_custom_call.1} parent=47 // loop_body
                %v362 = vld [vmem:[%s360] sm:%s324]
                %363 = vst [vmem:[%s361] sm:%s324] %v362
                %s364 = sadd.s32 1, %s359
                %p365 = scmp.ge.s32.totalorder %s364, %s347
                %s366 = scalar_select %p365, 0, %s364
                %s367 = smul.u32 %s366, 8
                %s368 = smul.u32 %s366, 8
                %s369 = scalar_lea.vmem %s350, %s367 [#allocation2]
                %s370 = scalar_lea.vmem %s352, %s368
              $region60: #{tpu_custom_call.1} parent=47 // loop_footer
                %s356 = sadd.s32 %s354, 1
              $region61: #{tpu_custom_call.1} parent=47 // loop_footer_branch
                %353 = sbr.rel target = $region57
              $region62: #{tpu_custom_call.1} parent=47 // loop_exit
                _
            $region48: #{tpu_custom_call.1} parent=39 // pred_fallthru
              _
          $region40: #{tpu_custom_call.1} parent=35 // pred_fallthru
            _
          %421 = vnop
        $region36: #{tpu_custom_call.1} parent=31 // pred_fallthru
          _
      $region32: #{tpu_custom_call.1} parent=5 // pred_fallthru
        _
      %p422 = scmp.le.s32.totalorder 2, %s9
      // Predicated region
      $region85: #{tpu_custom_call.1} parent=5 // pred_check
        %p423 = pneg %p422
      $region86: #{tpu_custom_call.1} parent=5 // pred_check_branch
        %425 = sbr.rel (%p423) target = $region88
      $region87: #{tpu_custom_call.1} parent=5 // pred_region
        %s426 = ssub.s32 %s9, 2
        // Predicated region
        $region89: #{tpu_custom_call.1} parent=87 // pred_check
          %p427 = pneg %p106
        $region90: #{tpu_custom_call.1} parent=87 // pred_check_branch
          %429 = sbr.rel (%p427) target = $region92
        $region91: #{tpu_custom_call.1} parent=87 // pred_region
          %s430 = sand.u32 %s91, 1
          %s431 = sand.u32 %s91, 1
          %s432 = smul.addr %s431, 16
          %s433 = scalar_lea.vmem [#allocation2], %s432
        $region92: #{tpu_custom_call.1} parent=87 // pred_fallthru
          _
      $region88: #{tpu_custom_call.1} parent=5 // pred_fallthru
        _
    $region6: #{tpu_custom_call.1} parent=1 // loop_footer
      %s13 = sadd.s32 1, %s9
    $region7: #{tpu_custom_call.1} parent=1 // loop_footer_branch
      %8 = sbr.rel target = $region3
    $region8: #{tpu_custom_call.1} parent=1 // loop_exit
      _

</llo_original>
